<compile_context>
chip_gen: v5e
topology: v5e:2x2
jax: 0.10.0
libtpu: 0.0.40
codegen_flags: <defaults>
</compile_context>

<pallas_src>
import jax
import jax.numpy as jnp
import numpy as np
from jax.experimental import pallas as pl
from jax.experimental.pallas import tpu as pltpu

_LANE = 128
_SUBLANE = 8


def _round_up(x, m):
    return (x + m - 1) // m * m


# ----------------------------------------------------------------------------
# Host-side, one-time parameter packing
# ----------------------------------------------------------------------------
def pack_params(params, *, hidden_size, sample_len, input_features,
                output_size, num_layers, matmul_dtype=jnp.float32):
    """Pack all module parameters into two lane-dense buffers.

    W  : (KPAD, 128*(3+L)) fused weight slab [attn | attn_combine | L x LSTM | out],
         zero-padded rows so padded/stale LHS lanes contribute exactly zero.
    V  : (8-padded rows, 128) bias / BN-scale row table (always f32).
    """
    H, T, F2, O, L = hidden_size, sample_len, input_features, output_size, num_layers

    K_attn, K_comb, K_lstm, K_out = F2 + L * H, F2 + H, 2 * H, H
    KPAD = _round_up(max(K_attn, K_comb, K_lstm, K_out), _LANE)
    NA, NC = _round_up(T, _LANE), _round_up(H, _LANE)
    NG, NO = _round_up(4 * H, _LANE), _round_up(O, _LANE)
    off_attn = 0
    off_comb = NA
    off_lstm = NA + NC
    off_out = NA + NC + L * NG
    n_total = off_out + NO

    W = np.zeros((KPAD, n_total), np.float32)
    # attn: Linear(F2 + L*H, T) acting on cat([x, h_flat])  -> one fused block
    W[:F2, off_attn:off_attn + T] = np.asarray(params["w_attn_x"])
    W[F2:K_attn, off_attn:off_attn + T] = np.asarray(params["w_attn_h"])
    # attn_combine: Linear(F2 + H, H) acting on cat([x_bn, attn_bn])
    W[:F2, off_comb:off_comb + H] = np.asarray(params["w_comb_x"])
    W[F2:K_comb, off_comb:off_comb + H] = np.asarray(params["w_comb_a"])
    # LSTM layer l: gates = [x_t | h_prev] @ vstack([w_ih, w_hh])
    for l in range(L):
        W[:H, off_lstm + l * NG:off_lstm + l * NG + 4 * H] = np.asarray(params["w_ih"][l])
        W[H:2 * H, off_lstm + l * NG:off_lstm + l * NG + 4 * H] = np.asarray(params["w_hh"][l])
    # out: Linear(H, O)
    W[:H, off_out:off_out + O] = np.asarray(params["w_out"])

    VEC_W = _round_up(max(T, H, O, F2 + H, 4 * H), _LANE)
    ROW_BA, ROW_BC, ROW_BO, ROW_G, ROW_BE, ROW_BL = 0, 1, 2, 3, 4, 5
    V = np.zeros((_round_up(ROW_BL + L, _SUBLANE), VEC_W), np.float32)
    V[ROW_BA, :T] = np.asarray(params["b_attn"]).reshape(-1)
    V[ROW_BC, :H] = np.asarray(params["b_comb"]).reshape(-1)
    V[ROW_BO, :O] = np.asarray(params["b_out"]).reshape(-1)
    V[ROW_G, :F2] = np.asarray(params["bn_g_x"]).reshape(-1)
    V[ROW_G, F2:F2 + H] = np.asarray(params["bn_g_a"]).reshape(-1)
    V[ROW_BE, :F2] = np.asarray(params["bn_b_x"]).reshape(-1)
    V[ROW_BE, F2:F2 + H] = np.asarray(params["bn_b_a"]).reshape(-1)
    for l in range(L):
        V[ROW_BL + l, :4 * H] = np.asarray(params["b_lstm"][l]).reshape(-1)

    dims = dict(H=H, T=T, F2=F2, O=O, L=L, KPAD=KPAD,
                NA=NA, NC=NC, NG=NG, NO=NO,
                off_attn=off_attn, off_comb=off_comb,
                off_lstm=off_lstm, off_out=off_out,
                rows=dict(ba=ROW_BA, bc=ROW_BC, bo=ROW_BO,
                          g=ROW_G, be=ROW_BE, bl=ROW_BL))
    return dict(W=jnp.asarray(W, dtype=matmul_dtype), V=jnp.asarray(V), dims=dims)


# ----------------------------------------------------------------------------
# Kernel
# ----------------------------------------------------------------------------
def _build_kernel(B, Bp, d, approx_softmax_recip):
    H, T, F2, O, L = d["H"], d["T"], d["F2"], d["O"], d["L"]
    KPAD = d["KPAD"]
    NA, NC, NG, NO = d["NA"], d["NC"], d["NG"], d["NO"]
    oa, oc, ol, oo = d["off_attn"], d["off_comb"], d["off_lstm"], d["off_out"]
    r = d["rows"]
    SLAB_W = _round_up(O + 2 * L * H, _LANE)

    def kernel(xh_ref, enc_ref, h0_ref, c0_ref, w_ref, v_ref, out_ref, lhs_ref):
        f32 = jnp.float32
        mm = w_ref.dtype                     # f32 (default) or bf16 behind flag

        # One-time init: zero the persistent LHS staging scratch and the output
        # slab padding (single full-tile stores; no per-dot zero materialization).
        lhs_ref[...] = jnp.zeros_like(lhs_ref)
        out_ref[...] = jnp.zeros_like(out_ref)

        vtab = v_ref[...]                    # bias/scale table -> vregs, once
        xh = xh_ref[...]                     # (Bp, KPAD) = [x | h_flat | 0]
        x = xh[:B, :F2]                      # (B, F2)
        enc = enc_ref[...]                   # (B, T, H)

        # ---- attention logits: single fused MXU dot (concat built host-side).
        logits = (jnp.dot(xh.astype(mm), w_ref[:, oa:oa + NA],
                          preferred_element_type=f32)[:B, :T]
                  + vtab[r["ba"]:r["ba"] + 1, :T])                    # (B, T)
        logits = logits - jnp.max(logits, axis=1, keepdims=True)
        e = jnp.exp(logits)
        denom = jnp.sum(e, axis=1, keepdims=True)
        # approx=True moves the divide to the EUP slot (prod setting); exact by
        # default to keep the strict 1e-3 f32 parity assert below bullet-proof.
        attn = e * pl.reciprocal(denom, approx=approx_softmax_recip)

        # ---- bmm((B,1,T),(B,T,H)) -> (B,H).  T is tiny (8): VPU broadcast-mul
        # + T-reduce.  Switch to einsum('bt,bth->bh') on the MXU once T >~ 32.
        attn_applied = jnp.sum(attn[:, :, None] * enc, axis=1)        # (B, H)

        # ---- BatchNorm1d(cat([x, attn_applied])), training-mode batch stats.
        cat2 = jnp.concatenate([x, attn_applied], axis=1)             # (B, F2+H)
        mean = jnp.mean(cat2, axis=0, keepdims=True)
        var = jnp.mean((cat2 - mean) ** 2, axis=0, keepdims=True)
        cat2 = ((cat2 - mean) * jax.lax.rsqrt(var + 1e-5)
                * vtab[r["g"]:r["g"] + 1, :F2 + H]
                + vtab[r["be"]:r["be"] + 1, :F2 + H])

        # ---- attn_combine + sigmoid.  Live slice -> staging scratch; the zero
        # weight rows of W nullify the (stale/zero) lanes beyond F2+H exactly.
        lhs_ref[0:B, 0:F2 + H] = cat2
        comb = jax.nn.sigmoid(
            jnp.dot(lhs_ref[...].astype(mm), w_ref[:, oc:oc + NC],
                    preferred_element_type=f32)[:B, :H]
            + vtab[r["bc"]:r["bc"] + 1, :H])                          # (B, H)

        # ---- LSTM (seq_len == 1): one fused [x_t | h_prev] dot per layer.
        # PyTorch gate order: i, f, g, o.  h0/c0 layer slices are sublane-
        # aligned (each (B,H) slice of the (L,B,H) input is its own tile).
        layer_in = comb
        h_list, c_list = [], []
        for l in range(L):
            h_prev = h0_ref[l]                                        # (B, H)
            c_prev = c0_ref[l]                                        # (B, H)
            lhs_ref[0:B, 0:2 * H] = jnp.concatenate([layer_in, h_prev], axis=1)
            gates = (jnp.dot(lhs_ref[...].astype(mm),
                             w_ref[:, ol + l * NG:ol + (l + 1) * NG],
                             preferred_element_type=f32)[:B, :4 * H]
                     + vtab[r["bl"] + l:r["bl"] + l + 1, :4 * H])     # (B, 4H)
            i_g = jax.nn.sigmoid(gates[:, 0 * H:1 * H])
            f_g = jax.nn.sigmoid(gates[:, 1 * H:2 * H])
            g_g = jnp.tanh(gates[:, 2 * H:3 * H])
            o_g = jax.nn.sigmoid(gates[:, 3 * H:4 * H])
            c_new = f_g * c_prev + i_g * g_g
            h_new = o_g * jnp.tanh(c_new)
            h_list.append(h_new)
            c_list.append(c_new)
            layer_in = h_new
            # TODO(synk): inter-layer LSTM dropout (training mode, L > 1) omitted.

        # ---- output head: tanh -> Linear.  Only lanes [0:H] rewritten; lanes
        # [H:2H] still hold h_prev but the out-block weight rows there are zero.
        lhs_ref[0:B, 0:H] = jnp.tanh(layer_in)
        out = (jnp.dot(lhs_ref[...].astype(mm), w_ref[:, oo:oo + NO],
                       preferred_element_type=f32)[:B, :O]
               + vtab[r["bo"]:r["bo"] + 1, :O])                       # (B, O)

        # ---- single lane-dense output slab: [out | h_1..h_L | c_1..c_L | 0].
        out_ref[0:B, 0:O + 2 * L * H] = jnp.concatenate(
            [out] + h_list + c_list, axis=1)

    return kernel, SLAB_W


# ----------------------------------------------------------------------------
# Wrapper
# ----------------------------------------------------------------------------
def attention_decoding(packed, x, encoder_outputs, hidden, *,
                       approx_softmax_recip=False):
    """x: (B, F2)   encoder_outputs: (B, T, H)   hidden: (h0, c0), each (L, B, H)."""
    h0, c0 = hidden
    d = packed["dims"]
    H, T, F2, O, L, KPAD = d["H"], d["T"], d["F2"], d["O"], d["L"], d["KPAD"]
    B = x.shape[0]
    Bp = _round_up(B, _SUBLANE)

    kernel, SLAB_W = _build_kernel(B, Bp, d, approx_softmax_recip)

    # Only host packing left: the attn-matmul LHS [x | h_flat | 0] (rows padded
    # to a sublane multiple).  h0/c0 go into the kernel untouched as (L, B, H).
    # Note: h0.reshape(B, L*H) reproduces torch's raw .view(1, B, L*H); for
    # L > 1 it mixes layers/batch exactly the way the original module does.
    h_flat = h0.reshape(B, L * H)
    xh = jnp.concatenate([x, h_flat], axis=1)
    xh = jnp.pad(xh, ((0, Bp - B), (0, KPAD - xh.shape[1])))

    W, V = packed["W"], packed["V"]
    flops = 2 * Bp * KPAD * (d["NA"] + d["NC"] + L * d["NG"] + d["NO"]) + 2 * B * T * H
    transcendentals = B * (T + 2 * H + 5 * L * H) + (F2 + H)
    bytes_accessed = (xh.size * 4 + encoder_outputs.size * 4 + h0.size * 4
                      + c0.size * 4 + V.size * 4 + Bp * SLAB_W * 4
                      + W.size * W.dtype.itemsize)

    vmem = lambda: pl.BlockSpec(memory_space=pltpu.MemorySpace.VMEM)
    # NOTE(scale-up): for B >= ~16 add a grid axis over batch with per-block
    # BlockSpecs + dimension_semantics=("parallel",) (v7x 2nd TensorCore), and
    # tile encoder_outputs over B/T before it approaches v7x's 32 MiB scoped
    # VMEM.  Pointless at B=2 / T=8, so the call stays gridless here.
    slab = pl.pallas_call(
        kernel,
        out_shape=jax.ShapeDtypeStruct((Bp, SLAB_W), jnp.float32),
        in_specs=[vmem(), vmem(), vmem(), vmem(), vmem(), vmem()],
        out_specs=vmem(),
        scratch_shapes=[pltpu.VMEM((Bp, KPAD), jnp.float32)],
        cost_estimate=pl.CostEstimate(flops=flops,
                                      transcendentals=transcendentals,
                                      bytes_accessed=bytes_accessed),
    )(xh, encoder_outputs, h0, c0, W, V)

    out = slab[:B, :O]
    h_out = jnp.transpose(slab[:B, O:O + L * H].reshape(B, L, H), (1, 0, 2))
    c_out = jnp.transpose(slab[:B, O + L * H:O + 2 * L * H].reshape(B, L, H), (1, 0, 2))
    return out, (h_out, c_out)


# ----------------------------------------------------------------------------
# Parameter init (mirrors the PyTorch module's shapes) and pure-JAX reference
# ----------------------------------------------------------------------------
def init_params(key, hidden_size, sample_len, input_features, output_size, num_layers):
    H, T, F2, O, L = hidden_size, sample_len, input_features, output_size, num_layers
    ks = jax.random.split(key, 10)

    def u(k, shape, fan_in):
        bound = 1.0 / float(np.sqrt(fan_in))
        return jax.random.uniform(k, shape, jnp.float32, -bound, bound)

    w_attn = u(ks[0], (F2 + H * L, T), F2 + H * L)
    b_attn = u(ks[1], (1, T), F2 + H * L)
    w_comb = u(ks[2], (F2 + H, H), F2 + H)
    b_comb = u(ks[3], (1, H), F2 + H)
    bn_g = jnp.ones((1, F2 + H), jnp.float32)
    bn_b = jnp.zeros((1, F2 + H), jnp.float32)
    w_ih = u(ks[4], (L, H, 4 * H), H)
    w_hh = u(ks[5], (L, H, 4 * H), H)
    b_ih = u(ks[6], (L, 1, 4 * H), H)
    b_hh = u(ks[7], (L, 1, 4 * H), H)
    w_out = u(ks[8], (H, O), H)
    b_out = u(ks[9], (1, O), H)

    return dict(
        w_attn_x=w_attn[:F2, :], w_attn_h=w_attn[F2:, :], b_attn=b_attn,
        w_comb_x=w_comb[:F2, :], w_comb_a=w_comb[F2:, :], b_comb=b_comb,
        bn_g_x=bn_g[:, :F2], bn_b_x=bn_b[:, :F2],
        bn_g_a=bn_g[:, F2:], bn_b_a=bn_b[:, F2:],
        w_ih=w_ih, w_hh=w_hh, b_lstm=b_ih + b_hh,
        w_out=w_out, b_out=b_out,
    )


def reference(params, x, enc, hidden):
    """Pure-JAX reproduction of the PyTorch forward (for validation)."""
    h0, c0 = hidden
    B, F2 = x.shape
    L, _, H = h0.shape
    h_flat = h0.reshape(B, L * H)
    cat = jnp.concatenate([x, h_flat], axis=1)
    w_attn = jnp.concatenate([params["w_attn_x"], params["w_attn_h"]], axis=0)
    attn = jax.nn.softmax(cat @ w_attn + params["b_attn"], axis=1)
    applied = jnp.sum(attn[:, :, None] * enc, axis=1)
    cat2 = jnp.concatenate([x, applied], axis=1)
    gamma = jnp.concatenate([params["bn_g_x"], params["bn_g_a"]], axis=1)
    beta = jnp.concatenate([params["bn_b_x"], params["bn_b_a"]], axis=1)
    mean = jnp.mean(cat2, axis=0, keepdims=True)
    var = jnp.mean((cat2 - mean) ** 2, axis=0, keepdims=True)
    cat2 = (cat2 - mean) / jnp.sqrt(var + 1e-5) * gamma + beta
    w_comb = jnp.concatenate([params["w_comb_x"], params["w_comb_a"]], axis=0)
    inp = jax.nn.sigmoid(cat2 @ w_comb + params["b_comb"])
    hs, cs = [], []
    for l in range(L):
        gates = inp @ params["w_ih"][l] + h0[l] @ params["w_hh"][l] + params["b_lstm"][l]
        i = jax.nn.sigmoid(gates[:, :H])
        f = jax.nn.sigmoid(gates[:, H:2 * H])
        g = jnp.tanh(gates[:, 2 * H:3 * H])
        o = jax.nn.sigmoid(gates[:, 3 * H:])
        c = f * c0[l] + i * g
        h = o * jnp.tanh(c)
        hs.append(h)
        cs.append(c)
        inp = h
    out = jnp.tanh(inp) @ params["w_out"] + params["b_out"]
    return out, (jnp.stack(hs), jnp.stack(cs))


if __name__ == "__main__":
    # Small shapes consistent with the module: B=2, T=8, F2=2, H=32, O=1, L=1
    B, T, F2, H, O, L = 2, 8, 2, 32, 1, 1
    key = jax.random.PRNGKey(0)
    k1, k2, k3, k4, kp = jax.random.split(key, 5)

    x_in = jax.random.normal(k1, (B, 1, F2), jnp.float32)      # previous prediction
    enc = jax.random.normal(k2, (B, T, H), jnp.float32)        # encoder outputs
    h0 = jax.random.normal(k3, (L, B, H), jnp.float32)
    c0 = jax.random.normal(k4, (L, B, H), jnp.float32)
    params = init_params(kp, H, T, F2, O, L)
    # Default f32 matmul operands (strict parity); pass matmul_dtype=jnp.bfloat16
    # here for MXU throughput at scale (re-validate tolerance first).
    packed = pack_params(params, hidden_size=H, sample_len=T, input_features=F2,
                         output_size=O, num_layers=L)

    x = x_in[:, 0, :]   # input.squeeze(1) (glue)

    out, (h_out, c_out) = attention_decoding(packed, x, enc, (h0, c0))
    jax.block_until_ready((out, h_out, c_out))

    ref_out, (ref_h, ref_c) = reference(params, x, enc, (h0, c0))
    np.testing.assert_allclose(np.asarray(out), np.asarray(ref_out), atol=1e-3, rtol=1e-3)
    np.testing.assert_allclose(np.asarray(h_out), np.asarray(ref_h), atol=1e-3, rtol=1e-3)
    np.testing.assert_allclose(np.asarray(c_out), np.asarray(ref_c), atol=1e-3, rtol=1e-3)

    print("KERNEL_OK")
</pallas_src>

<mosaic_0001>
module attributes {stable_mosaic.version = 11 : i64} {
  func.func @kernel(%arg0: memref<8x128xf32, #tpu.memory_space<vmem>>, %arg1: memref<2x8x32xf32, #tpu.memory_space<vmem>>, %arg2: memref<1x2x32xf32, #tpu.memory_space<vmem>>, %arg3: memref<1x2x32xf32, #tpu.memory_space<vmem>>, %arg4: memref<128x512xf32, #tpu.memory_space<vmem>>, %arg5: memref<8x128xf32, #tpu.memory_space<vmem>>, %arg6: memref<8x128xf32, #tpu.memory_space<vmem>>, %arg7: memref<8x128xf32, #tpu.memory_space<vmem>>) attributes {dimension_semantics = [], scalar_prefetch = 0 : i64, scratch_operands = 1 : i64, tpu.core_type = #tpu.core_type<tc>} {
    %cst = arith.constant 0.000000e+00 : f32
    %0 = vector.broadcast %cst : f32 to vector<8x128xf32>
    %c0 = arith.constant 0 : index
    %c0_0 = arith.constant 0 : index
    %1 = vector.load %arg7[%c0, %c0_0] : memref<8x128xf32, #tpu.memory_space<vmem>>, vector<8x128xf32>
    tpu.vector_store %arg7[%c0, %c0_0], %0 {strides = array<i32>} : memref<8x128xf32, #tpu.memory_space<vmem>>, vector<8x128xf32>,
    %cst_1 = arith.constant 0.000000e+00 : f32
    %2 = vector.broadcast %cst_1 : f32 to vector<8x128xf32>
    %c0_2 = arith.constant 0 : index
    %c0_3 = arith.constant 0 : index
    %3 = vector.load %arg6[%c0_2, %c0_3] : memref<8x128xf32, #tpu.memory_space<vmem>>, vector<8x128xf32>
    tpu.vector_store %arg6[%c0_2, %c0_3], %2 {strides = array<i32>} : memref<8x128xf32, #tpu.memory_space<vmem>>, vector<8x128xf32>,
    %c0_4 = arith.constant 0 : index
    %c0_5 = arith.constant 0 : index
    %4 = vector.load %arg5[%c0_4, %c0_5] : memref<8x128xf32, #tpu.memory_space<vmem>>, vector<8x128xf32>
    %c0_6 = arith.constant 0 : index
    %c0_7 = arith.constant 0 : index
    %5 = vector.load %arg0[%c0_6, %c0_7] : memref<8x128xf32, #tpu.memory_space<vmem>>, vector<8x128xf32>
    %6 = vector.extract_strided_slice %5 {offsets = [0, 0], sizes = [2, 2], strides = [1, 1]} : vector<8x128xf32> to vector<2x2xf32>
    %c0_8 = arith.constant 0 : index
    %c0_9 = arith.constant 0 : index
    %c0_10 = arith.constant 0 : index
    %7 = vector.load %arg1[%c0_8, %c0_9, %c0_10] : memref<2x8x32xf32, #tpu.memory_space<vmem>>, vector<2x8x32xf32>
    %c0_11 = arith.constant 0 : index
    %c0_12 = arith.constant 0 : index
    %8 = vector.load %arg4[%c0_11, %c0_12] : memref<128x512xf32, #tpu.memory_space<vmem>>, vector<128x128xf32>
    %cst_13 = arith.constant dense<0.000000e+00> : vector<8x128xf32>
    %9 = tpu.matmul %5, %8, %cst_13 {dimension_numbers = #tpu.dot_dimension_numbers<[1], [0], [0], [1], [0, 0, 1, 1], [], []>} : vector<8x128xf32>, vector<128x128xf32>, vector<8x128xf32> -> vector<8x128xf32>
    %10 = vector.extract_strided_slice %9 {offsets = [0, 0], sizes = [2, 8], strides = [1, 1]} : vector<8x128xf32> to vector<2x8xf32>
    %11 = vector.extract_strided_slice %4 {offsets = [0, 0], sizes = [1, 8], strides = [1, 1]} : vector<8x128xf32> to vector<1x8xf32>
    %12 = vector.broadcast %11 : vector<1x8xf32> to vector<2x8xf32>
    %13 = arith.addf %10, %12 : vector<2x8xf32>
    %cst_14 = arith.constant dense<0xFF800000> : vector<2xf32>
    %14 = vector.multi_reduction <maximumf>, %13, %cst_14 [1] : vector<2x8xf32> to vector<2xf32>
    %15 = vector.shape_cast %14 : vector<2xf32> to vector<2x1xf32>
    %16 = vector.broadcast %15 : vector<2x1xf32> to vector<2x8xf32>
    %17 = arith.subf %13, %16 : vector<2x8xf32>
    %18 = math.exp %17 : vector<2x8xf32>
    %cst_15 = arith.constant dense<0.000000e+00> : vector<2xf32>
    %19 = vector.multi_reduction <add>, %18, %cst_15 [1] : vector<2x8xf32> to vector<2xf32>
    %20 = vector.shape_cast %19 : vector<2xf32> to vector<2x1xf32>
    %21 = tpu.reciprocal %20 : vector<2x1xf32> -> vector<2x1xf32>
    %22 = vector.broadcast %21 : vector<2x1xf32> to vector<2x8xf32>
    %23 = arith.mulf %18, %22 : vector<2x8xf32>
    %24 = vector.shape_cast %23 : vector<2x8xf32> to vector<2x8x1xf32>
    %25 = vector.broadcast %24 : vector<2x8x1xf32> to vector<2x8x32xf32>
    %26 = arith.mulf %25, %7 : vector<2x8x32xf32>
    %cst_16 = arith.constant dense<0.000000e+00> : vector<2x32xf32>
    %27 = vector.multi_reduction <add>, %26, %cst_16 [1] : vector<2x8x32xf32> to vector<2x32xf32>
    %28 = tpu.concatenate %6, %27 in 1 : vector<2x2xf32>, vector<2x32xf32> -> vector<2x34xf32>
    %cst_17 = arith.constant dense<0.000000e+00> : vector<34xf32>
    %29 = vector.multi_reduction <add>, %28, %cst_17 [0] : vector<2x34xf32> to vector<34xf32>
    %30 = vector.shape_cast %29 : vector<34xf32> to vector<1x34xf32>
    %cst_18 = arith.constant 2.000000e+00 : f32
    %31 = vector.broadcast %cst_18 : f32 to vector<1x34xf32>
    %32 = arith.divf %30, %31 : vector<1x34xf32>
    %33 = vector.broadcast %32 : vector<1x34xf32> to vector<2x34xf32>
    %34 = arith.subf %28, %33 : vector<2x34xf32>
    %35 = arith.mulf %34, %34 : vector<2x34xf32>
    %cst_19 = arith.constant dense<0.000000e+00> : vector<34xf32>
    %36 = vector.multi_reduction <add>, %35, %cst_19 [0] : vector<2x34xf32> to vector<34xf32>
    %37 = vector.shape_cast %36 : vector<34xf32> to vector<1x34xf32>
    %cst_20 = arith.constant 2.000000e+00 : f32
    %38 = vector.broadcast %cst_20 : f32 to vector<1x34xf32>
    %39 = arith.divf %37, %38 : vector<1x34xf32>
    %40 = vector.broadcast %32 : vector<1x34xf32> to vector<2x34xf32>
    %41 = arith.subf %28, %40 : vector<2x34xf32>
    %cst_21 = arith.constant 9.99999974E-6 : f32
    %42 = vector.broadcast %cst_21 : f32 to vector<1x34xf32>
    %43 = arith.addf %39, %42 : vector<1x34xf32>
    %44 = math.rsqrt %43 : vector<1x34xf32>
    %45 = vector.broadcast %44 : vector<1x34xf32> to vector<2x34xf32>
    %46 = arith.mulf %41, %45 : vector<2x34xf32>
    %47 = vector.extract_strided_slice %4 {offsets = [3, 0], sizes = [1, 34], strides = [1, 1]} : vector<8x128xf32> to vector<1x34xf32>
    %48 = vector.broadcast %47 : vector<1x34xf32> to vector<2x34xf32>
    %49 = arith.mulf %46, %48 : vector<2x34xf32>
    %50 = vector.extract_strided_slice %4 {offsets = [4, 0], sizes = [1, 34], strides = [1, 1]} : vector<8x128xf32> to vector<1x34xf32>
    %51 = vector.broadcast %50 : vector<1x34xf32> to vector<2x34xf32>
    %52 = arith.addf %49, %51 : vector<2x34xf32>
    %c0_22 = arith.constant 0 : index
    %c0_23 = arith.constant 0 : index
    %53 = vector.load %arg7[%c0_22, %c0_23] : memref<8x128xf32, #tpu.memory_space<vmem>>, vector<2x34xf32>
    tpu.vector_store %arg7[%c0_22, %c0_23], %52 {strides = array<i32>} : memref<8x128xf32, #tpu.memory_space<vmem>>, vector<2x34xf32>,
    %c0_24 = arith.constant 0 : index
    %c0_25 = arith.constant 0 : index
    %54 = vector.load %arg7[%c0_24, %c0_25] : memref<8x128xf32, #tpu.memory_space<vmem>>, vector<8x128xf32>
    %c0_26 = arith.constant 0 : index
    %c128 = arith.constant 128 : index
    %55 = vector.load %arg4[%c0_26, %c128] : memref<128x512xf32, #tpu.memory_space<vmem>>, vector<128x128xf32>
    %cst_27 = arith.constant dense<0.000000e+00> : vector<8x128xf32>
    %56 = tpu.matmul %54, %55, %cst_27 {dimension_numbers = #tpu.dot_dimension_numbers<[1], [0], [0], [1], [0, 0, 1, 1], [], []>} : vector<8x128xf32>, vector<128x128xf32>, vector<8x128xf32> -> vector<8x128xf32>
    %57 = vector.extract_strided_slice %56 {offsets = [0, 0], sizes = [2, 32], strides = [1, 1]} : vector<8x128xf32> to vector<2x32xf32>
    %58 = vector.extract_strided_slice %4 {offsets = [1, 0], sizes = [1, 32], strides = [1, 1]} : vector<8x128xf32> to vector<1x32xf32>
    %59 = vector.broadcast %58 : vector<1x32xf32> to vector<2x32xf32>
    %60 = arith.addf %57, %59 : vector<2x32xf32>
    %61 = arith.negf %60 : vector<2x32xf32>
    %62 = math.exp %61 : vector<2x32xf32>
    %cst_28 = arith.constant 1.000000e+00 : f32
    %63 = vector.broadcast %cst_28 : f32 to vector<2x32xf32>
    %64 = arith.addf %63, %62 : vector<2x32xf32>
    %65 = arith.divf %63, %64 : vector<2x32xf32>
    %c0_29 = arith.constant 0 : index
    %c0_30 = arith.constant 0 : index
    %c0_31 = arith.constant 0 : index
    %66 = vector.load %arg2[%c0_29, %c0_30, %c0_31] : memref<1x2x32xf32, #tpu.memory_space<vmem>>, vector<1x2x32xf32>
    %67 = vector.shape_cast %66 : vector<1x2x32xf32> to vector<2x32xf32>
    %c0_32 = arith.constant 0 : index
    %c0_33 = arith.constant 0 : index
    %c0_34 = arith.constant 0 : index
    %68 = vector.load %arg3[%c0_32, %c0_33, %c0_34] : memref<1x2x32xf32, #tpu.memory_space<vmem>>, vector<1x2x32xf32>
    %69 = vector.shape_cast %68 : vector<1x2x32xf32> to vector<2x32xf32>
    %70 = tpu.concatenate %65, %67 in 1 : vector<2x32xf32>, vector<2x32xf32> -> vector<2x64xf32>
    %c0_35 = arith.constant 0 : index
    %c0_36 = arith.constant 0 : index
    %71 = vector.load %arg7[%c0_35, %c0_36] : memref<8x128xf32, #tpu.memory_space<vmem>>, vector<2x64xf32>
    tpu.vector_store %arg7[%c0_35, %c0_36], %70 {strides = array<i32>} : memref<8x128xf32, #tpu.memory_space<vmem>>, vector<2x64xf32>,
    %c0_37 = arith.constant 0 : index
    %c0_38 = arith.constant 0 : index
    %72 = vector.load %arg7[%c0_37, %c0_38] : memref<8x128xf32, #tpu.memory_space<vmem>>, vector<8x128xf32>
    %c0_39 = arith.constant 0 : index
    %c256 = arith.constant 256 : index
    %73 = vector.load %arg4[%c0_39, %c256] : memref<128x512xf32, #tpu.memory_space<vmem>>, vector<128x128xf32>
    %cst_40 = arith.constant dense<0.000000e+00> : vector<8x128xf32>
    %74 = tpu.matmul %72, %73, %cst_40 {dimension_numbers = #tpu.dot_dimension_numbers<[1], [0], [0], [1], [0, 0, 1, 1], [], []>} : vector<8x128xf32>, vector<128x128xf32>, vector<8x128xf32> -> vector<8x128xf32>
    %75 = vector.extract_strided_slice %74 {offsets = [0, 0], sizes = [2, 128], strides = [1, 1]} : vector<8x128xf32> to vector<2x128xf32>
    %76 = vector.extract_strided_slice %4 {offsets = [5, 0], sizes = [1, 128], strides = [1, 1]} : vector<8x128xf32> to vector<1x128xf32>
    %77 = vector.broadcast %76 : vector<1x128xf32> to vector<2x128xf32>
    %78 = arith.addf %75, %77 : vector<2x128xf32>
    %79 = vector.extract_strided_slice %78 {offsets = [0, 0], sizes = [2, 32], strides = [1, 1]} : vector<2x128xf32> to vector<2x32xf32>
    %80 = arith.negf %79 : vector<2x32xf32>
    %81 = math.exp %80 : vector<2x32xf32>
    %cst_41 = arith.constant 1.000000e+00 : f32
    %82 = vector.broadcast %cst_41 : f32 to vector<2x32xf32>
    %83 = arith.addf %82, %81 : vector<2x32xf32>
    %84 = arith.divf %82, %83 : vector<2x32xf32>
    %85 = vector.extract_strided_slice %78 {offsets = [0, 32], sizes = [2, 32], strides = [1, 1]} : vector<2x128xf32> to vector<2x32xf32>
    %86 = arith.negf %85 : vector<2x32xf32>
    %87 = math.exp %86 : vector<2x32xf32>
    %cst_42 = arith.constant 1.000000e+00 : f32
    %88 = vector.broadcast %cst_42 : f32 to vector<2x32xf32>
    %89 = arith.addf %88, %87 : vector<2x32xf32>
    %90 = arith.divf %88, %89 : vector<2x32xf32>
    %91 = vector.extract_strided_slice %78 {offsets = [0, 64], sizes = [2, 32], strides = [1, 1]} : vector<2x128xf32> to vector<2x32xf32>
    %92 = math.tanh %91 : vector<2x32xf32>
    %93 = vector.extract_strided_slice %78 {offsets = [0, 96], sizes = [2, 32], strides = [1, 1]} : vector<2x128xf32> to vector<2x32xf32>
    %94 = arith.negf %93 : vector<2x32xf32>
    %95 = math.exp %94 : vector<2x32xf32>
    %cst_43 = arith.constant 1.000000e+00 : f32
    %96 = vector.broadcast %cst_43 : f32 to vector<2x32xf32>
    %97 = arith.addf %96, %95 : vector<2x32xf32>
    %98 = arith.divf %96, %97 : vector<2x32xf32>
    %99 = arith.mulf %90, %69 : vector<2x32xf32>
    %100 = arith.mulf %84, %92 : vector<2x32xf32>
    %101 = arith.addf %99, %100 : vector<2x32xf32>
    %102 = math.tanh %101 : vector<2x32xf32>
    %103 = arith.mulf %98, %102 : vector<2x32xf32>
    %104 = math.tanh %103 : vector<2x32xf32>
    %c0_44 = arith.constant 0 : index
    %c0_45 = arith.constant 0 : index
    %105 = vector.load %arg7[%c0_44, %c0_45] : memref<8x128xf32, #tpu.memory_space<vmem>>, vector<2x32xf32>
    tpu.vector_store %arg7[%c0_44, %c0_45], %104 {strides = array<i32>} : memref<8x128xf32, #tpu.memory_space<vmem>>, vector<2x32xf32>,
    %c0_46 = arith.constant 0 : index
    %c0_47 = arith.constant 0 : index
    %106 = vector.load %arg7[%c0_46, %c0_47] : memref<8x128xf32, #tpu.memory_space<vmem>>, vector<8x128xf32>
    %c0_48 = arith.constant 0 : index
    %c384 = arith.constant 384 : index
    %107 = vector.load %arg4[%c0_48, %c384] : memref<128x512xf32, #tpu.memory_space<vmem>>, vector<128x128xf32>
    %cst_49 = arith.constant dense<0.000000e+00> : vector<8x128xf32>
    %108 = tpu.matmul %106, %107, %cst_49 {dimension_numbers = #tpu.dot_dimension_numbers<[1], [0], [0], [1], [0, 0, 1, 1], [], []>} : vector<8x128xf32>, vector<128x128xf32>, vector<8x128xf32> -> vector<8x128xf32>
    %109 = vector.extract_strided_slice %108 {offsets = [0, 0], sizes = [2, 1], strides = [1, 1]} : vector<8x128xf32> to vector<2x1xf32>
    %110 = vector.extract_strided_slice %4 {offsets = [2, 0], sizes = [1, 1], strides = [1, 1]} : vector<8x128xf32> to vector<1x1xf32>
    %111 = vector.broadcast %110 : vector<1x1xf32> to vector<2x1xf32>
    %112 = arith.addf %109, %111 : vector<2x1xf32>
    %113 = tpu.concatenate %112, %103, %101 in 1 : vector<2x1xf32>, vector<2x32xf32>, vector<2x32xf32> -> vector<2x65xf32>
    %c0_50 = arith.constant 0 : index
    %c0_51 = arith.constant 0 : index
    %114 = vector.load %arg6[%c0_50, %c0_51] : memref<8x128xf32, #tpu.memory_space<vmem>>, vector<2x65xf32>
    tpu.vector_store %arg6[%c0_50, %c0_51], %113 {strides = array<i32>} : memref<8x128xf32, #tpu.memory_space<vmem>>, vector<2x65xf32>,
    return
  }
}

</mosaic_0001>

<llo_original>
// kernel: tpu_custom_call.1
$region0: #{tpu_custom_call.1}
  #allocation0 [shape = 'u32[]', space=smem, size = 0x4, offset = 0x4, fixed_abs, tag = 'smem constant byte address 0x4 - core index']
  #allocation1 [shape = 'u32[72,128]{1,0:T(1,128)}', space=vmem, size = 0x9000, scoped, tag = 'internal scratch']
  #allocation2 [shape = 'f32[8,128]{1,0:T(8,128)}', space=vmem, size = 0x1000, scoped, tag = 'scratch operand']
  %s0 = inlined_call_operand.hbm [shape: f32[8,128], index: 0, kind: input, shape index: {}]
  %s1 = inlined_call_operand.hbm [shape: f32[2,8,32], index: 1, kind: input, shape index: {}]
  %s2 = inlined_call_operand.hbm [shape: f32[1,2,32], index: 2, kind: input, shape index: {}]
  %s3 = inlined_call_operand.vmem [shape: f32[1,2,32], index: 3, kind: input, shape index: {}]
  %s4 = inlined_call_operand.hbm [shape: f32[128,512], index: 4, kind: input, shape index: {}]
  %s5 = inlined_call_operand.hbm [shape: f32[8,128], index: 5, kind: input, shape index: {}]
  %s6 = inlined_call_operand.hbm [shape: f32[8,128], index: 6, kind: output, shape index: {}]
  %s7 = sld [smem:[#allocation0]]
  $region54: #{tpu_custom_call.1} parent=0
    _
  %s9 = ssub.s32 1, %s7
  %s10 = scalar_select 0, %s9, %s7
  $region1: #{tpu_custom_call.1} parent=0
    #allocation3 [shape = 'u8[4096]{0}', space=vmem, size = 0x1000, scoped, tag = 'input window, operand 0, single buffered']
    #allocation4 [shape = 's32[1]{0}', space=sflag, size = 0x4, scoped, tag = 'scoped memory for tpu_custom_call.1']
    #allocation5 [shape = 's32[1]{0}', space=sflag, size = 0x4, scoped, tag = 'scoped memory for tpu_custom_call.1']
    #allocation6 [shape = 'u8[8192]{0}', space=vmem, size = 0x2000, scoped, tag = 'input window, operand 1, single buffered']
    #allocation7 [shape = 's32[1]{0}', space=sflag, size = 0x4, scoped, tag = 'scoped memory for tpu_custom_call.1']
    #allocation8 [shape = 'u8[1024]{0}', space=vmem, size = 0x400, scoped, tag = 'input window, operand 2, single buffered']
    #allocation9 [shape = 'u8[262144]{0}', space=vmem, size = 0x40000, scoped, tag = 'input window, operand 4, single buffered']
    #allocation10 [shape = 's32[1]{0}', space=sflag, size = 0x4, scoped, tag = 'scoped memory for tpu_custom_call.1']
    #allocation11 [shape = 'u8[4096]{0}', space=vmem, size = 0x1000, scoped, tag = 'input window, operand 5, single buffered']
    #allocation12 [shape = 'u8[4096]{0}', space=vmem, size = 0x1000, scoped, tag = 'output window, operand 0, single buffered']
    %11 = vsyncpa [#allocation4], 0
    %12 = vsyncpa [#allocation7], 0
    %13 = vsyncpa [#allocation10], 0
    %14 = vsyncpa [#allocation5], 0
    // Predicated region
    $region2: #{tpu_custom_call.1} parent=1 // pred_check
      _
    $region3: #{tpu_custom_call.1} parent=1 // pred_check_branch
      %16 = sbr.rel (0) target = $region5
    $region4: #{tpu_custom_call.1} parent=1 // pred_region
      %18 = vsyncadd [#allocation4], 0
      %s20 = sshll.u32 %s0, 4
      %s21 = int_to_ptr.hbm [resolvable:$true] %s20
      %s22 = sshll.u32 [#allocation3], 4
      %s23 = int_to_ptr.vmem [resolvable:$true] %s22
      %25 = dma.hbm_to_vmem [thread:$0]  %s21, 128, %s23, [#allocation4]
    $region5: #{tpu_custom_call.1} parent=1 // pred_fallthru
      _
    // Predicated region
    $region6: #{tpu_custom_call.1} parent=1 // pred_check
      _
    $region7: #{tpu_custom_call.1} parent=1 // pred_check_branch
      %27 = sbr.rel (0) target = $region9
    $region8: #{tpu_custom_call.1} parent=1 // pred_region
      %29 = vsyncadd [#allocation7], 0
      %s30 = sshll.u32 %s1, 4
      %s31 = int_to_ptr.hbm [resolvable:$true] %s30
      %s32 = sshll.u32 [#allocation6], 4
      %s33 = int_to_ptr.vmem [resolvable:$true] %s32
      %38 = dma.hbm_to_vmem [thread:$0]  %s31, 256, %s33, [#allocation7], 128, 128, 8
    $region9: #{tpu_custom_call.1} parent=1 // pred_fallthru
      _
    // Predicated region
    $region10: #{tpu_custom_call.1} parent=1 // pred_check
      _
    $region11: #{tpu_custom_call.1} parent=1 // pred_check_branch
      %40 = sbr.rel (0) target = $region13
    $region12: #{tpu_custom_call.1} parent=1 // pred_region
      %42 = vsyncadd [#allocation7], 0
      %s44 = sshll.u32 %s2, 4
      %s45 = int_to_ptr.hbm [resolvable:$true] %s44
      %s46 = sshll.u32 [#allocation8], 4
      %s47 = int_to_ptr.vmem [resolvable:$true] %s46
      %49 = dma.hbm_to_vmem [thread:$0]  %s45, 32, %s47, [#allocation7]
    $region13: #{tpu_custom_call.1} parent=1 // pred_fallthru
      _
    // Predicated region
    $region14: #{tpu_custom_call.1} parent=1 // pred_check
      _
    $region15: #{tpu_custom_call.1} parent=1 // pred_check_branch
      %51 = sbr.rel (0) target = $region17
    $region16: #{tpu_custom_call.1} parent=1 // pred_region
      _
    $region17: #{tpu_custom_call.1} parent=1 // pred_fallthru
      _
    // Predicated region
    $region18: #{tpu_custom_call.1} parent=1 // pred_check
      _
    $region19: #{tpu_custom_call.1} parent=1 // pred_check_branch
      %53 = sbr.rel (0) target = $region21
    $region20: #{tpu_custom_call.1} parent=1 // pred_region
      %55 = vsyncadd [#allocation10], 0
      %s56 = sshll.u32 %s4, 4
      %s57 = int_to_ptr.hbm [resolvable:$true] %s56
      %s58 = sshll.u32 [#allocation9], 4
      %s59 = int_to_ptr.vmem [resolvable:$true] %s58
      %64 = dma.hbm_to_vmem [thread:$0]  %s57, 8192, %s59, [#allocation10], 512, 512, 32
    $region21: #{tpu_custom_call.1} parent=1 // pred_fallthru
      _
    // Predicated region
    $region22: #{tpu_custom_call.1} parent=1 // pred_check
      _
    $region23: #{tpu_custom_call.1} parent=1 // pred_check_branch
      %66 = sbr.rel (0) target = $region25
    $region24: #{tpu_custom_call.1} parent=1 // pred_region
      %68 = vsyncadd [#allocation10], 0
      %s70 = sshll.u32 %s5, 4
      %s71 = int_to_ptr.hbm [resolvable:$true] %s70
      %s72 = sshll.u32 [#allocation11], 4
      %s73 = int_to_ptr.vmem [resolvable:$true] %s72
      %75 = dma.hbm_to_vmem [thread:$0]  %s71, 128, %s73, [#allocation10]
    $region25: #{tpu_custom_call.1} parent=1 // pred_fallthru
      _
    // Predicated region
    $region26: #{tpu_custom_call.1} parent=1 // pred_check
      _
    $region27: #{tpu_custom_call.1} parent=1 // pred_check_branch
      %77 = sbr.rel (0) target = $region29
    $region28: #{tpu_custom_call.1} parent=1 // pred_region
      %79 = dma.done [#allocation4], 128
    $region29: #{tpu_custom_call.1} parent=1 // pred_fallthru
      _
    // Predicated region
    $region30: #{tpu_custom_call.1} parent=1 // pred_check
      _
    $region31: #{tpu_custom_call.1} parent=1 // pred_check_branch
      %81 = sbr.rel (0) target = $region33
    $region32: #{tpu_custom_call.1} parent=1 // pred_region
      %83 = dma.done [#allocation7], 256
    $region33: #{tpu_custom_call.1} parent=1 // pred_fallthru
      _
    // Predicated region
    $region34: #{tpu_custom_call.1} parent=1 // pred_check
      _
    $region35: #{tpu_custom_call.1} parent=1 // pred_check_branch
      %85 = sbr.rel (0) target = $region37
    $region36: #{tpu_custom_call.1} parent=1 // pred_region
      %87 = dma.done [#allocation7], 32
    $region37: #{tpu_custom_call.1} parent=1 // pred_fallthru
      _
    // Predicated region
    $region38: #{tpu_custom_call.1} parent=1 // pred_check
      _
    $region39: #{tpu_custom_call.1} parent=1 // pred_check_branch
      %89 = sbr.rel (0) target = $region41
    $region40: #{tpu_custom_call.1} parent=1 // pred_region
      %91 = dma.done [#allocation10], 8192
    $region41: #{tpu_custom_call.1} parent=1 // pred_fallthru
      _
    // Predicated region
    $region42: #{tpu_custom_call.1} parent=1 // pred_check
      _
    $region43: #{tpu_custom_call.1} parent=1 // pred_check_branch
      %93 = sbr.rel (0) target = $region45
    $region44: #{tpu_custom_call.1} parent=1 // pred_region
      %95 = dma.done [#allocation10], 128
    $region45: #{tpu_custom_call.1} parent=1 // pred_fallthru
      _
    %96 = vst [vmem:[#allocation2] sm:$0xff] 0.0
    %97 = vst [vmem:[#allocation12] sm:$0xff] 0.0
    %v98 = vld [vmem:[#allocation11] sm:$0xff]
    %v99 = vld [vmem:[#allocation3] sm:$0xff]
    %v100 = vld [vmem:[#allocation6] sm:$0xff]
    %v101 = vld [vmem:[#allocation6 + $0x8] sm:$0xff]
    %v102 = vld [vmem:[#allocation9] sm:$0xff]
    %v103 = vld [vmem:[#allocation9 + $0x20] sm:$0xff]
    %v104 = vld [vmem:[#allocation9 + $0x40] sm:$0xff]
    %v105 = vld [vmem:[#allocation9 + $0x60] sm:$0xff]
    %v106 = vld [vmem:[#allocation9 + $0x80] sm:$0xff]
    %v107 = vld [vmem:[#allocation9 + $0xa0] sm:$0xff]
    %v108 = vld [vmem:[#allocation9 + $0xc0] sm:$0xff]
    %v109 = vld [vmem:[#allocation9 + $0xe0] sm:$0xff]
    %v110 = vld [vmem:[#allocation9 + $0x100] sm:$0xff]
    %v111 = vld [vmem:[#allocation9 + $0x120] sm:$0xff]
    %v112 = vld [vmem:[#allocation9 + $0x140] sm:$0xff]
    %v113 = vld [vmem:[#allocation9 + $0x160] sm:$0xff]
    %v114 = vld [vmem:[#allocation9 + $0x180] sm:$0xff]
    %v115 = vld [vmem:[#allocation9 + $0x1a0] sm:$0xff]
    %v116 = vld [vmem:[#allocation9 + $0x1c0] sm:$0xff]
    %v117 = vld [vmem:[#allocation9 + $0x1e0] sm:$0xff]
    %118 = vmatpush.msra.mxu0 %v117
    %119 = vmatpush.msra.mxu0 %v116
    %120 = vmatpush.msra.mxu0 %v115
    %121 = vmatpush.msra.mxu0 %v114
    %122 = vmatpush.msra.mxu0 %v113
    %123 = vmatpush.msra.mxu0 %v112
    %124 = vmatpush.msra.mxu0 %v111
    %125 = vmatpush.msra.mxu0 %v110
    %126 = vmatpush.msra.mxu0 %v109
    %127 = vmatpush.msra.mxu0 %v108
    %128 = vmatpush.msra.mxu0 %v107
    %129 = vmatpush.msra.mxu0 %v106
    %130 = vmatpush.msra.mxu0 %v105
    %131 = vmatpush.msra.mxu0 %v104
    %132 = vmatpush.msra.mxu0 %v103
    %133 = vmatpush.msra.mxu0 %v102
    %134 = vmatmul.f32.gmra.mxu0 %v99
    %v135 = vpop.f32.mrf.mxu0
    %v136 = vadd.f32 0.0, %v135
    %137 = vdwg.mxu0
    %v138 = vperm.slane %v98, 0
    %v139 = vadd.f32 %v136, %v138
    %vm140 = vcmask 58368
    %v141 = vsel %vm140, %v139, -inf
    %142 = vmax.xlane.f32.xlu0 %v141
    %v143 = vpop.xlane.xlu0 %142
    %v144 = vsub.f32 %v139, %v143
    %v145 = vmul.f32 %v144, 1.442695
    %v146 = vpow.pop %v145
    %v147 = vsel %vm140, %v146, 0.0
    %148 = vadd.xlane.f32.xlu0 %v147
    %v149 = vpop.xlane.xlu0 %148
    %v150 = vrcp.pop %v149
    %v151 = vmul.f32 %v149, %v150
    %v152 = vsub.f32 1.0, %v151
    %v153 = vmul.f32 %v150, %v152
    %v154 = vadd.f32 %v150, %v153
    %vm155 = vweird.f32 %v149
    %vm156 = vweird.f32 %v150
    %vm157 = vmor %vm155, %vm156
    %v158 = vsel %vm157, %v150, %v154
    %v159 = vand.u32 2147483647, %v149
    %vm160 = vcmp.eq.f32.partialorder %v159, 8.507059e+37
    %v161 = vand.u32 %v149, 2147483648
    %v162 = vor.u32 1.1754944e-38, %v161
    %v163 = vsel %vm160, %v162, %v158
    %v164 = vmul.f32 %v146, %v163
    %v165 = vperm.slane %v164, 0
    %v166 = vlaneseq
    %v167 = vshrl.u32 %v166, 7
    %169 = vset.pattern.permute.xlu0 %v167
    %170 = vperm.xlu0 %169, %v165
    %v171 = vpop.permute.xlu0 %170
    %v172 = vperm.slane %v164, 1
    %v173 = vlaneseq
    %v174 = vshrl.u32 %v173, 7
    %176 = vset.pattern.permute.xlu0 %v174
    %177 = vperm.xlu0 %176, %v172
    %v178 = vpop.permute.xlu0 %177
    %v179 = vmul.f32 %v171, %v100
    %v180 = vmul.f32 %v178, %v101
    %vm181 = vcmask 261120
    %v182 = vsel %vm181, %v179, 0.0
    %v183 = vrot.slane %v182, 4
    %v184 = vadd.f32 %v182, %v183
    %v185 = vrot.slane %v184, 2
    %v186 = vadd.f32 %v184, %v185
    %v187 = vrot.slane %v186, 1
    %v188 = vadd.f32 %v186, %v187
    %v189 = vsel %vm181, %v180, 0.0
    %v190 = vrot.slane %v189, 4
    %v191 = vadd.f32 %v189, %v190
    %v192 = vrot.slane %v191, 2
    %v193 = vadd.f32 %v191, %v192
    %v194 = vrot.slane %v193, 1
    %v195 = vadd.f32 %v193, %v194
    %vm198 = vcmask 1041409
    %v199 = vsel %vm198, %v195, %v188
    %200 = vrot.lane.b32.xlu0 %v199, 2
    %v201 = vpop.permute.xlu0 %200
    %vm203 = vcmask 15360
    %v204 = vsel %vm203, %v99, %v201
    %vm205 = vcmask 271360
    %v206 = vsel %vm205, %v204, 0.0
    %v207 = vrot.slane %v206, 4
    %v208 = vadd.f32 %v206, %v207
    %v209 = vrot.slane %v208, 2
    %v210 = vadd.f32 %v208, %v209
    %v211 = vrot.slane %v210, 1
    %v212 = vadd.f32 %v210, %v211
    %v213 = vrcp.pop 2.0
    %v214 = vmul.f32 2.0, %v213
    %v215 = vsub.f32 1.0, %v214
    %v216 = vmul.f32 %v213, %v215
    %v217 = vadd.f32 %v213, %v216
    %vm218 = vweird.f32 %v213
    %v219 = vsel %vm218, %v213, %v217
    %v220 = vmul.f32 %v212, %v219
    %v221 = vsub.f32 %v204, %v220
    %v222 = vmul.f32 %v221, %v221
    %v223 = vsel %vm205, %v222, 0.0
    %v224 = vrot.slane %v223, 4
    %v225 = vadd.f32 %v223, %v224
    %v226 = vrot.slane %v225, 2
    %v227 = vadd.f32 %v225, %v226
    %v228 = vrot.slane %v227, 1
    %v229 = vadd.f32 %v227, %v228
    %v230 = vmul.f32 %v229, %v219
    %v231 = vadd.f32 %v230, 1e-05
    %v232 = vrsqrt.pop %v231
    %v233 = vmul.f32 %v232, %v231
    %v234 = vmul.f32 %v233, %v232
    %v235 = vmul.f32 0.5, %v234
    %v236 = vsub.f32 1.5, %v235
    %v237 = vmul.f32 %v232, %v236
    %vm238 = vweird.f32 %v231
    %vm239 = vweird.f32 %v232
    %vm240 = vmor %vm238, %vm239
    %v241 = vsel %vm240, %v232, %v237
    %v242 = vmul.f32 %v221, %v241
    %v243 = vperm.slane %v98, 3
    %v244 = vmul.f32 %v242, %v243
    %v245 = vperm.slane %v98, 4
    %v246 = vadd.f32 %v244, %v245
    %247 = vst.msk [vmem:[#allocation2] sm:$0x3] %vm205, %v246
    %v248 = vld [vmem:[#allocation2] sm:$0xff]
    %v249 = vld [vmem:[#allocation9 + $0x8] sm:$0xff]
    %v250 = vld [vmem:[#allocation9 + $0x28] sm:$0xff]
    %v251 = vld [vmem:[#allocation9 + $0x48] sm:$0xff]
    %v252 = vld [vmem:[#allocation9 + $0x68] sm:$0xff]
    %v253 = vld [vmem:[#allocation9 + $0x88] sm:$0xff]
    %v254 = vld [vmem:[#allocation9 + $0xa8] sm:$0xff]
    %v255 = vld [vmem:[#allocation9 + $0xc8] sm:$0xff]
    %v256 = vld [vmem:[#allocation9 + $0xe8] sm:$0xff]
    %v257 = vld [vmem:[#allocation9 + $0x108] sm:$0xff]
    %v258 = vld [vmem:[#allocation9 + $0x128] sm:$0xff]
    %v259 = vld [vmem:[#allocation9 + $0x148] sm:$0xff]
    %v260 = vld [vmem:[#allocation9 + $0x168] sm:$0xff]
    %v261 = vld [vmem:[#allocation9 + $0x188] sm:$0xff]
    %v262 = vld [vmem:[#allocation9 + $0x1a8] sm:$0xff]
    %v263 = vld [vmem:[#allocation9 + $0x1c8] sm:$0xff]
    %v264 = vld [vmem:[#allocation9 + $0x1e8] sm:$0xff]
    %265 = vmatpush.msra.mxu0 %v264
    %266 = vmatpush.msra.mxu0 %v263
    %267 = vmatpush.msra.mxu0 %v262
    %268 = vmatpush.msra.mxu0 %v261
    %269 = vmatpush.msra.mxu0 %v260
    %270 = vmatpush.msra.mxu0 %v259
    %271 = vmatpush.msra.mxu0 %v258
    %272 = vmatpush.msra.mxu0 %v257
    %273 = vmatpush.msra.mxu0 %v256
    %274 = vmatpush.msra.mxu0 %v255
    %275 = vmatpush.msra.mxu0 %v254
    %276 = vmatpush.msra.mxu0 %v253
    %277 = vmatpush.msra.mxu0 %v252
    %278 = vmatpush.msra.mxu0 %v251
    %279 = vmatpush.msra.mxu0 %v250
    %280 = vmatpush.msra.mxu0 %v249
    %281 = vmatmul.f32.gmra.mxu0 %v248
    %v282 = vpop.f32.mrf.mxu0
    %v283 = vadd.f32 0.0, %v282
    %284 = vdwg.mxu0
    %v285 = vperm.slane %v98, 1
    %v286 = vadd.f32 %v283, %v285
    %v287 = vxor.u32 %v286, 2147483648
    %v288 = vmul.f32 %v287, 1.442695
    %v289 = vpow.pop %v288
    %v290 = vadd.f32 %v289, 1.0
    %v291 = vrcp.pop %v290
    %v292 = vmul.f32 %v290, %v291
    %v293 = vsub.f32 1.0, %v292
    %v294 = vmul.f32 %v291, %v293
    %v295 = vadd.f32 %v291, %v294
    %vm296 = vweird.f32 %v290
    %vm297 = vweird.f32 %v291
    %vm298 = vmor %vm296, %vm297
    %v299 = vsel %vm298, %v291, %v295
    %v300 = vand.u32 2147483647, %v290
    %vm301 = vcmp.eq.f32.partialorder %v300, 8.507059e+37
    %v302 = vand.u32 %v290, 2147483648
    %v303 = vor.u32 1.1754944e-38, %v302
    %v304 = vsel %vm301, %v303, %v299
    %v305 = vmul.f32 1.0, %v304
    %v306 = vld [vmem:[#allocation8] sm:$0x3]
    %v307 = vld [vmem:[%s3] sm:$0x3]
    %309 = vrot.lane.b32.xlu0 %v306, 32
    %v310 = vpop.permute.xlu0 %309
    %v312 = vsel %vm181, %v305, %v310
    %vm313 = vcmask 517120
    %314 = vst.msk [vmem:[#allocation2] sm:$0x3] %vm313, %v312
    %v315 = vld [vmem:[#allocation2] sm:$0xff]
    %v316 = vld [vmem:[#allocation9 + $0x10] sm:$0xff]
    %v317 = vld [vmem:[#allocation9 + $0x30] sm:$0xff]
    %v318 = vld [vmem:[#allocation9 + $0x50] sm:$0xff]
    %v319 = vld [vmem:[#allocation9 + $0x70] sm:$0xff]
    %v320 = vld [vmem:[#allocation9 + $0x90] sm:$0xff]
    %v321 = vld [vmem:[#allocation9 + $0xb0] sm:$0xff]
    %v322 = vld [vmem:[#allocation9 + $0xd0] sm:$0xff]
    %v323 = vld [vmem:[#allocation9 + $0xf0] sm:$0xff]
    %v324 = vld [vmem:[#allocation9 + $0x110] sm:$0xff]
    %v325 = vld [vmem:[#allocation9 + $0x130] sm:$0xff]
    %v326 = vld [vmem:[#allocation9 + $0x150] sm:$0xff]
    %v327 = vld [vmem:[#allocation9 + $0x170] sm:$0xff]
    %v328 = vld [vmem:[#allocation9 + $0x190] sm:$0xff]
    %v329 = vld [vmem:[#allocation9 + $0x1b0] sm:$0xff]
    %v330 = vld [vmem:[#allocation9 + $0x1d0] sm:$0xff]
    %v331 = vld [vmem:[#allocation9 + $0x1f0] sm:$0xff]
    %332 = vmatpush.msra.mxu0 %v331
    %333 = vmatpush.msra.mxu0 %v330
    %334 = vmatpush.msra.mxu0 %v329
    %335 = vmatpush.msra.mxu0 %v328
    %336 = vmatpush.msra.mxu0 %v327
    %337 = vmatpush.msra.mxu0 %v326
    %338 = vmatpush.msra.mxu0 %v325
    %339 = vmatpush.msra.mxu0 %v324
    %340 = vmatpush.msra.mxu0 %v323
    %341 = vmatpush.msra.mxu0 %v322
    %342 = vmatpush.msra.mxu0 %v321
    %343 = vmatpush.msra.mxu0 %v320
    %344 = vmatpush.msra.mxu0 %v319
    %345 = vmatpush.msra.mxu0 %v318
    %346 = vmatpush.msra.mxu0 %v317
    %347 = vmatpush.msra.mxu0 %v316
    %348 = vmatmul.f32.gmra.mxu0 %v315
    %v349 = vpop.f32.mrf.mxu0
    %v350 = vadd.f32 0.0, %v349
    %351 = vdwg.mxu0
    %v352 = vperm.slane %v98, 5
    %v353 = vadd.f32 %v350, %v352
    %v354 = vxor.u32 %v353, 2147483648
    %v355 = vmul.f32 %v354, 1.442695
    %v356 = vpow.pop %v355
    %v357 = vadd.f32 %v356, 1.0
    %v358 = vrcp.pop %v357
    %v359 = vmul.f32 %v357, %v358
    %v360 = vsub.f32 1.0, %v359
    %v361 = vmul.f32 %v358, %v360
    %v362 = vadd.f32 %v358, %v361
    %vm363 = vweird.f32 %v357
    %vm364 = vweird.f32 %v358
    %vm365 = vmor %vm363, %vm364
    %v366 = vsel %vm365, %v358, %v362
    %v367 = vand.u32 2147483647, %v357
    %vm368 = vcmp.eq.f32.partialorder %v367, 8.507059e+37
    %v369 = vand.u32 %v357, 2147483648
    %v370 = vor.u32 1.1754944e-38, %v369
    %v371 = vsel %vm368, %v370, %v366
    %v372 = vmul.f32 1.0, %v371
    %v373 = vtanh.pop %v353
    %375 = vrot.lane.b32.xlu0 %v307, 32
    %v376 = vpop.permute.xlu0 %375
    %v378 = vmul.f32 %v372, %v376
    %380 = vrot.lane.b32.xlu0 %v373, 64
    %v381 = vpop.permute.xlu0 %380
    %v383 = vmul.f32 %v372, %v381
    %385 = vrot.lane.b32.xlu0 %v383, 32
    %v386 = vpop.permute.xlu0 %385
    %v388 = vadd.f32 %v378, %v386
    %v389 = vtanh.pop %v388
    %391 = vrot.lane.b32.xlu0 %v389, 64
    %v392 = vpop.permute.xlu0 %391
    %v394 = vmul.f32 %v372, %v392
    %v395 = vtanh.pop %v394
    %397 = vrot.lane.b32.xlu0 %v395, 32
    %v398 = vpop.permute.xlu0 %397
    %vm400 = vcmask 254976
    %401 = vst.msk [vmem:[#allocation2] sm:$0x3] %vm400, %v398
    %v402 = vld [vmem:[#allocation2] sm:$0xff]
    %v403 = vld [vmem:[#allocation9 + $0x18] sm:$0xff]
    %v404 = vld [vmem:[#allocation9 + $0x38] sm:$0xff]
    %v405 = vld [vmem:[#allocation9 + $0x58] sm:$0xff]
    %v406 = vld [vmem:[#allocation9 + $0x78] sm:$0xff]
    %v407 = vld [vmem:[#allocation9 + $0x98] sm:$0xff]
    %v408 = vld [vmem:[#allocation9 + $0xb8] sm:$0xff]
    %v409 = vld [vmem:[#allocation9 + $0xd8] sm:$0xff]
    %v410 = vld [vmem:[#allocation9 + $0xf8] sm:$0xff]
    %v411 = vld [vmem:[#allocation9 + $0x118] sm:$0xff]
    %v412 = vld [vmem:[#allocation9 + $0x138] sm:$0xff]
    %v413 = vld [vmem:[#allocation9 + $0x158] sm:$0xff]
    %v414 = vld [vmem:[#allocation9 + $0x178] sm:$0xff]
    %v415 = vld [vmem:[#allocation9 + $0x198] sm:$0xff]
    %v416 = vld [vmem:[#allocation9 + $0x1b8] sm:$0xff]
    %v417 = vld [vmem:[#allocation9 + $0x1d8] sm:$0xff]
    %v418 = vld [vmem:[#allocation9 + $0x1f8] sm:$0xff]
    %419 = vmatpush.msra.mxu0 %v418
    %420 = vmatpush.msra.mxu0 %v417
    %421 = vmatpush.msra.mxu0 %v416
    %422 = vmatpush.msra.mxu0 %v415
    %423 = vmatpush.msra.mxu0 %v414
    %424 = vmatpush.msra.mxu0 %v413
    %425 = vmatpush.msra.mxu0 %v412
    %426 = vmatpush.msra.mxu0 %v411
    %427 = vmatpush.msra.mxu0 %v410
    %428 = vmatpush.msra.mxu0 %v409
    %429 = vmatpush.msra.mxu0 %v408
    %430 = vmatpush.msra.mxu0 %v407
    %431 = vmatpush.msra.mxu0 %v406
    %432 = vmatpush.msra.mxu0 %v405
    %433 = vmatpush.msra.mxu0 %v404
    %434 = vmatpush.msra.mxu0 %v403
    %435 = vmatmul.f32.gmra.mxu0 %v402
    %v436 = vpop.f32.mrf.mxu0
    %v437 = vadd.f32 0.0, %v436
    %438 = vdwg.mxu0
    %v439 = vperm.slane %v98, 2
    %v440 = vadd.f32 %v437, %v439
    %442 = vrot.lane.b32.xlu0 %v394, 33
    %v443 = vpop.permute.xlu0 %442
    %446 = vrot.lane.b32.xlu0 %v388, 1
    %v447 = vpop.permute.xlu0 %446
    %vm449 = vcmask 7168
    %v450 = vsel %vm449, %v440, %v443
    %vm451 = vcmask 269312
    %v452 = vsel %vm451, %v450, %v447
    %vm453 = vcmask 525312
    %454 = vst.msk [vmem:[#allocation12] sm:$0x3] %vm453, %v452
    // Predicated region
    $region46: #{tpu_custom_call.1} parent=1 // pred_check
      _
    $region47: #{tpu_custom_call.1} parent=1 // pred_check_branch
      %456 = sbr.rel (0) target = $region49
    $region48: #{tpu_custom_call.1} parent=1 // pred_region
      %458 = vsyncadd [#allocation5], 0
      %s460 = sshll.u32 [#allocation12], 4
      %s461 = int_to_ptr.vmem [resolvable:$true] %s460
      %s462 = sshll.u32 %s6, 4
      %s463 = int_to_ptr.hbm [resolvable:$true] %s462
      %465 = dma.vmem_to_hbm [thread:$0]  %s461, 128, %s463, [#allocation5]
    $region49: #{tpu_custom_call.1} parent=1 // pred_fallthru
      _
    // Predicated region
    $region50: #{tpu_custom_call.1} parent=1 // pred_check
      _
    $region51: #{tpu_custom_call.1} parent=1 // pred_check_branch
      %467 = sbr.rel (0) target = $region53
    $region52: #{tpu_custom_call.1} parent=1 // pred_region
      %469 = dma.done [#allocation5], 128
    $region53: #{tpu_custom_call.1} parent=1 // pred_fallthru
      _
    %470 = vsyncpa [#allocation4], 1
    %471 = vsyncpa [#allocation7], 1
    %472 = vsyncpa [#allocation10], 1
    %473 = vsyncpa [#allocation5], 1

</llo_original>
